<compile_context>
chip_gen: v5e
topology: v5e:2x2
jax: 0.10.0
libtpu: 0.0.40
codegen_flags: <defaults>
</compile_context>

<pallas_src>
import functools
import math

import jax
import jax.numpy as jnp
from jax.experimental import pallas as pl
from jax.experimental.pallas import tpu as pltpu

# ----------------------------- module configuration ------------------------------
D_MODEL = 40
KERNEL_WIDTH = 3
SUPERSAMPLING = [5, 5, 2, 1, 1]
DILATIONS = [1, 1, 2, 4, 8]
COMPRESSION = (1, 1)

_gcd = math.gcd(COMPRESSION[0], COMPRESSION[1])
QUERY_MULT = COMPRESSION[0] // _gcd
CONTENT_MULT = COMPRESSION[1] // _gcd
QUERY_KERNEL = 1 * QUERY_MULT          # query_width (=1) * multiplier
CONTENT_KERNEL = KERNEL_WIDTH * CONTENT_MULT
QUERY_STRIDE = QUERY_MULT
CONTENT_STRIDE = CONTENT_MULT

SUBHEADS = len(DILATIONS)
HEADS = sum(SUPERSAMPLING)
D_INTERNAL = D_MODEL // SUBHEADS
HEAD_TO_SUB = [s for s, c in enumerate(SUPERSAMPLING) for _ in range(c)]

OUT_PAD = max(128, ((D_MODEL + 127) // 128) * 128)   # lane-dense output width

assert QUERY_KERNEL == 1, "kernel implements the default compression ratio (1,1)"


# ----------------------------- parameters (deterministic) ------------------------
def make_params(key):
    ks = jax.random.split(key, 10)
    sc = 0.1
    p = {
        "Wq": sc * jax.random.normal(ks[0], (SUBHEADS, D_MODEL, D_INTERNAL), jnp.float32),
        "bq": sc * jax.random.normal(ks[1], (SUBHEADS, 1, D_INTERNAL), jnp.float32),
        "Wk": sc * jax.random.normal(ks[2], (SUBHEADS, D_MODEL, D_INTERNAL), jnp.float32),
        "bk": sc * jax.random.normal(ks[3], (SUBHEADS, 1, D_INTERNAL), jnp.float32),
        "Wv": sc * jax.random.normal(ks[4], (HEADS, D_MODEL, D_INTERNAL), jnp.float32),
        "bv": sc * jax.random.normal(ks[5], (HEADS, 1, D_INTERNAL), jnp.float32),
        "Ws": sc * jax.random.normal(ks[6], (HEADS, CONTENT_KERNEL, CONTENT_KERNEL), jnp.float32),
        "bs": sc * jax.random.normal(ks[7], (HEADS, 1, CONTENT_KERNEL), jnp.float32),
        "Wc": sc * jax.random.normal(ks[8], (HEADS, D_INTERNAL, D_MODEL), jnp.float32),
        "bc": sc * jax.random.normal(ks[9], (1, D_MODEL), jnp.float32),
    }
    return p


# ----------------------------- dilocal windowing (glue, plain JAX) ----------------
def _window_rows(x, kernel, stride, dilation):
    """x: (B, N, C) -> (B, kernel, L, C): centered, zero-padded dilated windows."""
    B, N, C = x.shape
    L = N // stride
    centers = jnp.arange(L) * stride
    offs = (jnp.arange(kernel) - (kernel - 1) // 2) * dilation
    pos = centers[:, None] + offs[None, :]                           # (L, kernel)
    valid = (pos >= 0) & (pos < N)
    pos_c = jnp.clip(pos, 0, N - 1)
    win = x[:, pos_c, :]                                             # (B, L, kernel, C)
    win = jnp.where(valid[None, :, :, None], win, 0.0)
    return jnp.transpose(win, (0, 2, 1, 3))                          # (B, kernel, L, C)


def dilocal_windows(x, kernel, stride, dilations):
    """x: (B, N, D) -> (B, n_dil, kernel, L, D)."""
    return jnp.stack([_window_rows(x, kernel, stride, d) for d in dilations], axis=1)


# ----------------------------- packed weights (wrapper-side, once) ----------------
def pack_params(P):
    D, S, H, e, Kc = D_MODEL, SUBHEADS, HEADS, D_INTERNAL, CONTENT_KERNEL
    bf16 = jnp.bfloat16
    # Fused Q projection (kernel-side bf16 MXU operand): every dilation sees the same
    # width-1 query window, so all subheads project in one (40, 40) matmul.
    Wq_cat = jnp.transpose(P["Wq"], (1, 0, 2)).reshape(D, S * e)
    bq_cat = P["bq"].reshape(1, S * e)
    # Per-subhead K / per-head V projections, fused along output lanes. These are applied
    # in the wrapper *before* windowing (projection commutes with the zero-masked gather),
    # so the kernel streams 40 / 112 projected lanes per slot instead of 200 raw lanes.
    Wk_cat = jnp.transpose(P["Wk"], (1, 0, 2)).reshape(D, S * e)
    bk_cat = P["bk"].reshape(1, S * e)
    Wv_cat = jnp.transpose(P["Wv"], (1, 0, 2)).reshape(D, H * e)
    bv_cat = P["bv"].reshape(1, H * e)
    # Fused banded-score reduce + positional sampler.
    #   M_samp[j, s*e+c, m*H+h] = Ws[h][j, m]  (if sub(h)==s), so that
    #   sc[r, m*H+h] = sum_j (qp * kp_j) @ M_samp[j]  ==  score[r, sub(h), :] @ Ws[h].
    M_samp = jnp.zeros((Kc, S * e, Kc * H), jnp.float32)
    for h, s in enumerate(HEAD_TO_SUB):
        blk = jnp.broadcast_to(P["Ws"][h][:, None, :], (Kc, e, Kc))
        M_samp = M_samp.at[:, s * e:(s + 1) * e, h::H].set(blk)
    bs_flat = jnp.transpose(P["bs"][:, 0, :], (1, 0)).reshape(1, Kc * H)
    # Head -> lane-block expansion of the softmax weights (done on the MXU).
    RepH = jnp.repeat(jnp.eye(H, dtype=jnp.float32), e, axis=1)               # (H, H*e)
    # Collapse projection, zero-padded to a lane-dense 128-wide output slab.
    Wc_pad = jnp.zeros((H * e, OUT_PAD), jnp.float32).at[:, :D].set(P["Wc"].reshape(H * e, D))
    bc_pad = jnp.zeros((1, OUT_PAD), jnp.float32).at[:, :D].set(P["bc"])
    return {
        "Wq_cat": Wq_cat.astype(bf16), "bq_cat": bq_cat,
        "Wk_cat": Wk_cat, "bk_cat": bk_cat,            # used in the wrapper (f32 XLA matmul)
        "Wv_cat": Wv_cat, "bv_cat": bv_cat,            # used in the wrapper (f32 XLA matmul)
        "M_samp": M_samp.astype(bf16), "bs_flat": bs_flat,
        "RepH": RepH.astype(bf16),
        "Wc_pad": Wc_pad.astype(bf16), "bc_pad": bc_pad,
    }


# ----------------------------- Pallas kernel --------------------------------------
def _banded_attn_kernel(q_ref, kwin_ref, vwin_ref,
                        wq_ref, bq_ref, ms_ref, bs_ref,
                        rep_ref, wc_ref, bc_ref, out_ref,
                        *, kc, heads):
    f32, bf16 = jnp.float32, jnp.bfloat16
    H = heads

    # Fused Q projection: all subheads at once, (rows, 40) @ (40, 40) bf16 / f32 acc.
    qp = jnp.dot(q_ref[...], wq_ref[...], preferred_element_type=f32) + bq_ref[...]

    # ---- phase 1: banded scores + positional supersampler + grouped softmax ----
    # Only the K windows are touched here; V windows wait until phase 2 so the live
    # intermediates stay small (no per-slot V tensors carried across the body).
    sc = None                                              # (rows, Kc*H), lane = m*H + h
    for j in range(kc):
        prod = (qp * kwin_ref[j].astype(f32)).astype(bf16)
        term = jnp.dot(prod, ms_ref[j], preferred_element_type=f32)
        sc = term if sc is None else sc + term
    sc = sc + bs_ref[...]

    cols = [sc[:, m * H:(m + 1) * H] for m in range(kc)]   # per-slot logits (rows, H)
    mx = cols[0]
    for m in range(1, kc):
        mx = jnp.maximum(mx, cols[m])
    ex = [jnp.exp(c - mx) for c in cols]
    den = ex[0]
    for m in range(1, kc):
        den = den + ex[m]
    inv = pl.reciprocal(den, approx=True)                  # EUP slot, off the VALU

    # ---- phase 2: attention-weighted values + fused collapse ----
    attn = None
    for m in range(kc):
        p_m = (ex[m] * inv).astype(bf16)                                      # (rows, H)
        w_m = jnp.dot(p_m, rep_ref[...], preferred_element_type=f32)          # (rows, H*e)
        contrib = w_m * vwin_ref[m].astype(f32)
        attn = contrib if attn is None else attn + contrib                    # (rows, H*e)

    # Fused collapse projection, lane-dense (128-wide) bf16 store.
    out = jnp.dot(attn.astype(bf16), wc_ref[...], preferred_element_type=f32) + bc_ref[...]
    out_ref[...] = out.astype(out_ref.dtype)


def _round_up(x, m):
    return -(-x // m) * m


def _pick_row_tile(rows):
    # Multiple of 16 (bf16 sublane tile). Guarantee >= 2 grid steps whenever there is
    # enough work so the "parallel" grid axis can shard across v7x's two TensorCores,
    # and cap the tile at 1024 rows so block + double-buffer stays far below v7x's
    # 64 MiB VMEM (and comfortably within v5e/v6e budgets). The wrapper pads the row
    # count up to a multiple of the chosen tile, so no degenerate small-tile fallback.
    r16 = _round_up(max(rows, 1), 16)
    if r16 <= 16:
        return 16
    half = _round_up(r16 // 2, 16)
    return min(1024, half)


def banded_attention_pallas(q, k, v, params, *, row_tile=None):
    B, N, D = q.shape
    assert D == D_MODEL
    S, H, e, Kc = SUBHEADS, HEADS, D_INTERNAL, CONTENT_KERNEL
    L = N // QUERY_STRIDE
    assert L == N // CONTENT_STRIDE, "query/content window counts must match"
    R = B * L

    pk = pack_params(params)

    # ---- project-before-window (wrapper, plain JAX) -------------------------------
    # The K/V projections are linear (no bias), so they commute with the zero-masked
    # window gather; biases are added AFTER windowing so out-of-range slots still see
    # bias-only keys/values, matching the reference semantics exactly.
    q_rows = q[:, ::QUERY_STRIDE, :].reshape(R, D)                     # query kernel == 1
    kproj = jnp.dot(k, pk["Wk_cat"])                                   # (B, N, S*e)
    vproj = jnp.dot(v, pk["Wv_cat"])                                   # (B, N, H*e)

    k_wins, v_wins = [], []
    head_off = 0
    for s, (dil, cnt) in enumerate(zip(DILATIONS, SUPERSAMPLING)):
        k_wins.append(_window_rows(kproj[..., s * e:(s + 1) * e],
                                   Kc, CONTENT_STRIDE, dil))            # (B, Kc, L, e)
        v_wins.append(_window_rows(vproj[..., head_off * e:(head_off + cnt) * e],
                                   Kc, CONTENT_STRIDE, dil))            # (B, Kc, L, cnt*e)
        head_off += cnt
    kwin = jnp.concatenate(k_wins, axis=-1) + pk["bk_cat"].reshape(1, 1, 1, S * e)
    vwin = jnp.concatenate(v_wins, axis=-1) + pk["bv_cat"].reshape(1, 1, 1, H * e)
    kwin = jnp.transpose(kwin, (1, 0, 2, 3)).reshape(Kc, R, S * e)     # rows = (b, l)
    vwin = jnp.transpose(vwin, (1, 0, 2, 3)).reshape(Kc, R, H * e)

    # ---- tile choice + pad the row axis up to a multiple of the tile --------------
    TR = row_tile if row_tile is not None else _pick_row_tile(R)
    assert TR % 16 == 0
    R_pad = _round_up(R, TR)
    if R_pad != R:
        q_rows = jnp.pad(q_rows, ((0, R_pad - R), (0, 0)))
        kwin = jnp.pad(kwin, ((0, 0), (0, R_pad - R), (0, 0)))
        vwin = jnp.pad(vwin, ((0, 0), (0, R_pad - R), (0, 0)))

    # bf16 streams for the MXU (f32 accumulation inside the kernel), halves DMA bytes.
    q_rows = q_rows.astype(jnp.bfloat16)
    kwin = kwin.astype(jnp.bfloat16)
    vwin = vwin.astype(jnp.bfloat16)

    grid = (R_pad // TR,)

    in_specs = [
        pl.BlockSpec((TR, D), lambda i: (i, 0)),
        pl.BlockSpec((Kc, TR, S * e), lambda i: (0, i, 0)),
        pl.BlockSpec((Kc, TR, H * e), lambda i: (0, i, 0)),
        # weights: constant index_map -> stay resident across grid steps
        pl.BlockSpec((D, S * e), lambda i: (0, 0)),
        pl.BlockSpec((1, S * e), lambda i: (0, 0)),
        pl.BlockSpec((Kc, S * e, Kc * H), lambda i: (0, 0, 0)),
        pl.BlockSpec((1, Kc * H), lambda i: (0, 0)),
        pl.BlockSpec((H, H * e), lambda i: (0, 0)),
        pl.BlockSpec((H * e, OUT_PAD), lambda i: (0, 0)),
        pl.BlockSpec((1, OUT_PAD), lambda i: (0, 0)),
    ]
    out_specs = pl.BlockSpec((TR, OUT_PAD), lambda i: (i, 0))

    kernel = functools.partial(_banded_attn_kernel, kc=Kc, heads=H)
    out = pl.pallas_call(
        kernel,
        out_shape=jax.ShapeDtypeStruct((R_pad, OUT_PAD), jnp.bfloat16),
        grid=grid,
        in_specs=in_specs,
        out_specs=out_specs,
        compiler_params=pltpu.CompilerParams(
            dimension_semantics=("parallel",),
            vmem_limit_bytes=32 * 1024 * 1024,
        ),
    )(q_rows, kwin, vwin,
      pk["Wq_cat"], pk["bq_cat"], pk["M_samp"], pk["bs_flat"],
      pk["RepH"], pk["Wc_pad"], pk["bc_pad"])

    return out[:R, :D].astype(jnp.float32).reshape(B, L, D)


# ----------------------------- pure-JAX reference (for a sanity check) ------------
def banded_attention_reference(q, k, v, P):
    lq = dilocal_windows(q, QUERY_KERNEL, QUERY_STRIDE, DILATIONS)[:, :, 0]   # (B,S,L,D)
    lk = dilocal_windows(k, CONTENT_KERNEL, CONTENT_STRIDE, DILATIONS)        # (B,S,Kc,L,D)
    lv_sub = dilocal_windows(v, CONTENT_KERNEL, CONTENT_STRIDE, DILATIONS)
    h2s = jnp.array(HEAD_TO_SUB)
    lv = lv_sub[:, h2s]                                                       # repeat_interleave
    qp = jnp.einsum("bsld,sde->bsle", lq, P["Wq"]) + P["bq"][None]
    kp = jnp.einsum("bskld,sde->bskle", lk, P["Wk"]) + P["bk"][None, :, None]
    score = jnp.einsum("bsle,bskle->bslk", qp, kp)
    score_h = score[:, h2s]
    sc = jnp.einsum("bhlk,hkm->bhlm", score_h, P["Ws"]) + P["bs"][None]
    p = jax.nn.softmax(sc, axis=-1)
    vp = jnp.einsum("bhkld,hde->bhkle", lv, P["Wv"]) + P["bv"][None, :, None]
    attn = jnp.einsum("bhlk,bhkle->bhle", p, vp)
    out = jnp.einsum("bhle,hed->bld", attn, P["Wc"]) + P["bc"][None]
    return out


# ----------------------------- main -----------------------------------------------
if __name__ == "__main__":
    B, N = 2, 16
    key = jax.random.PRNGKey(0)
    kq, kk, kv, kp = jax.random.split(key, 4)
    q = jax.random.normal(kq, (B, N, D_MODEL), jnp.float32)
    k = jax.random.normal(kk, (B, N, D_MODEL), jnp.float32)
    v = jax.random.normal(kv, (B, N, D_MODEL), jnp.float32)
    params = make_params(kp)

    out = jax.block_until_ready(banded_attention_pallas(q, k, v, params))
    ref = jax.block_until_ready(banded_attention_reference(q, k, v, params))

    assert out.shape == (B, N, D_MODEL)
    assert bool(jnp.all(jnp.isfinite(out)))
    max_err = float(jnp.max(jnp.abs(out - ref)))
    # End-to-end bf16 datapath (bf16 streams, bf16 MXU operands with f32 accumulation,
    # bf16 output, approx reciprocal) vs. an all-f32 reference -> small rounding error.
    assert bool(jnp.allclose(out, ref, atol=7.5e-2, rtol=5e-2)), (
        f"kernel/reference mismatch: max abs err {max_err}")

    print("KERNEL_OK")
</pallas_src>

<mosaic_0001>
module attributes {stable_mosaic.version = 11 : i64} {
  func.func @_banded_attn_kernel(%arg0: i32, %arg1: memref<16x40xbf16, #tpu.memory_space<vmem>>, %arg2: memref<3x16x40xbf16, #tpu.memory_space<vmem>>, %arg3: memref<3x16x112xbf16, #tpu.memory_space<vmem>>, %arg4: memref<40x40xbf16, #tpu.memory_space<vmem>>, %arg5: memref<1x40xf32, #tpu.memory_space<vmem>>, %arg6: memref<3x40x42xbf16, #tpu.memory_space<vmem>>, %arg7: memref<1x42xf32, #tpu.memory_space<vmem>>, %arg8: memref<14x112xbf16, #tpu.memory_space<vmem>>, %arg9: memref<112x128xbf16, #tpu.memory_space<vmem>>, %arg10: memref<1x128xf32, #tpu.memory_space<vmem>>, %arg11: memref<16x128xbf16, #tpu.memory_space<vmem>>) attributes {dimension_semantics = [#tpu.dimension_semantics<parallel>], iteration_bounds = array<i64: 2>, scalar_prefetch = 0 : i64, scratch_operands = 0 : i64, tpu.core_type = #tpu.core_type<tc>, window_params = [{transform_indices = @transform_0, window_bounds = array<i64: 16, 40>}, {transform_indices = @transform_1, window_bounds = array<i64: 3, 16, 40>}, {transform_indices = @transform_2, window_bounds = array<i64: 3, 16, 112>}, {pipeline_mode = #tpu.pipeline_mode<synchronous>, transform_indices = @transform_3, window_bounds = array<i64: 40, 40>}, {pipeline_mode = #tpu.pipeline_mode<synchronous>, transform_indices = @transform_4, window_bounds = array<i64: 1, 40>}, {pipeline_mode = #tpu.pipeline_mode<synchronous>, transform_indices = @transform_5, window_bounds = array<i64: 3, 40, 42>}, {pipeline_mode = #tpu.pipeline_mode<synchronous>, transform_indices = @transform_6, window_bounds = array<i64: 1, 42>}, {pipeline_mode = #tpu.pipeline_mode<synchronous>, transform_indices = @transform_7, window_bounds = array<i64: 14, 112>}, {pipeline_mode = #tpu.pipeline_mode<synchronous>, transform_indices = @transform_8, window_bounds = array<i64: 112, 128>}, {pipeline_mode = #tpu.pipeline_mode<synchronous>, transform_indices = @transform_9, window_bounds = array<i64: 1, 128>}, {transform_indices = @transform_10, window_bounds = array<i64: 16, 128>}]} {
    %c0 = arith.constant 0 : index
    %c0_0 = arith.constant 0 : index
    %0 = vector.load %arg1[%c0, %c0_0] : memref<16x40xbf16, #tpu.memory_space<vmem>>, vector<16x40xbf16>
    %c0_1 = arith.constant 0 : index
    %c0_2 = arith.constant 0 : index
    %1 = vector.load %arg4[%c0_1, %c0_2] : memref<40x40xbf16, #tpu.memory_space<vmem>>, vector<40x40xbf16>
    %cst = arith.constant dense<0.000000e+00> : vector<16x40xf32>
    %2 = tpu.matmul %0, %1, %cst {dimension_numbers = #tpu.dot_dimension_numbers<[1], [0], [0], [1], [0, 0, 1, 1], [], []>} : vector<16x40xbf16>, vector<40x40xbf16>, vector<16x40xf32> -> vector<16x40xf32>
    %c0_3 = arith.constant 0 : index
    %c0_4 = arith.constant 0 : index
    %3 = vector.load %arg5[%c0_3, %c0_4] : memref<1x40xf32, #tpu.memory_space<vmem>>, vector<1x40xf32>
    %4 = vector.broadcast %3 : vector<1x40xf32> to vector<16x40xf32>
    %5 = arith.addf %2, %4 : vector<16x40xf32>
    %c0_5 = arith.constant 0 : index
    %c0_6 = arith.constant 0 : index
    %c0_7 = arith.constant 0 : index
    %6 = vector.load %arg2[%c0_5, %c0_6, %c0_7] : memref<3x16x40xbf16, #tpu.memory_space<vmem>>, vector<1x16x40xbf16>
    %7 = vector.shape_cast %6 : vector<1x16x40xbf16> to vector<16x40xbf16>
    %8 = arith.extf %7 : vector<16x40xbf16> to vector<16x40xf32>
    %9 = arith.mulf %5, %8 : vector<16x40xf32>
    %10 = arith.truncf %9 : vector<16x40xf32> to vector<16x40xbf16>
    %c0_8 = arith.constant 0 : index
    %c0_9 = arith.constant 0 : index
    %c0_10 = arith.constant 0 : index
    %11 = vector.load %arg6[%c0_8, %c0_9, %c0_10] : memref<3x40x42xbf16, #tpu.memory_space<vmem>>, vector<1x40x42xbf16>
    %12 = vector.shape_cast %11 : vector<1x40x42xbf16> to vector<40x42xbf16>
    %cst_11 = arith.constant dense<0.000000e+00> : vector<16x42xf32>
    %13 = tpu.matmul %10, %12, %cst_11 {dimension_numbers = #tpu.dot_dimension_numbers<[1], [0], [0], [1], [0, 0, 1, 1], [], []>} : vector<16x40xbf16>, vector<40x42xbf16>, vector<16x42xf32> -> vector<16x42xf32>
    %c1 = arith.constant 1 : index
    %c0_12 = arith.constant 0 : index
    %c0_13 = arith.constant 0 : index
    %14 = vector.load %arg2[%c1, %c0_12, %c0_13] : memref<3x16x40xbf16, #tpu.memory_space<vmem>>, vector<1x16x40xbf16>
    %15 = vector.shape_cast %14 : vector<1x16x40xbf16> to vector<16x40xbf16>
    %16 = arith.extf %15 : vector<16x40xbf16> to vector<16x40xf32>
    %17 = arith.mulf %5, %16 : vector<16x40xf32>
    %18 = arith.truncf %17 : vector<16x40xf32> to vector<16x40xbf16>
    %c1_14 = arith.constant 1 : index
    %c0_15 = arith.constant 0 : index
    %c0_16 = arith.constant 0 : index
    %19 = vector.load %arg6[%c1_14, %c0_15, %c0_16] : memref<3x40x42xbf16, #tpu.memory_space<vmem>>, vector<1x40x42xbf16>
    %20 = vector.shape_cast %19 : vector<1x40x42xbf16> to vector<40x42xbf16>
    %cst_17 = arith.constant dense<0.000000e+00> : vector<16x42xf32>
    %21 = tpu.matmul %18, %20, %cst_17 {dimension_numbers = #tpu.dot_dimension_numbers<[1], [0], [0], [1], [0, 0, 1, 1], [], []>} : vector<16x40xbf16>, vector<40x42xbf16>, vector<16x42xf32> -> vector<16x42xf32>
    %22 = arith.addf %13, %21 : vector<16x42xf32>
    %c2 = arith.constant 2 : index
    %c0_18 = arith.constant 0 : index
    %c0_19 = arith.constant 0 : index
    %23 = vector.load %arg2[%c2, %c0_18, %c0_19] : memref<3x16x40xbf16, #tpu.memory_space<vmem>>, vector<1x16x40xbf16>
    %24 = vector.shape_cast %23 : vector<1x16x40xbf16> to vector<16x40xbf16>
    %25 = arith.extf %24 : vector<16x40xbf16> to vector<16x40xf32>
    %26 = arith.mulf %5, %25 : vector<16x40xf32>
    %27 = arith.truncf %26 : vector<16x40xf32> to vector<16x40xbf16>
    %c2_20 = arith.constant 2 : index
    %c0_21 = arith.constant 0 : index
    %c0_22 = arith.constant 0 : index
    %28 = vector.load %arg6[%c2_20, %c0_21, %c0_22] : memref<3x40x42xbf16, #tpu.memory_space<vmem>>, vector<1x40x42xbf16>
    %29 = vector.shape_cast %28 : vector<1x40x42xbf16> to vector<40x42xbf16>
    %cst_23 = arith.constant dense<0.000000e+00> : vector<16x42xf32>
    %30 = tpu.matmul %27, %29, %cst_23 {dimension_numbers = #tpu.dot_dimension_numbers<[1], [0], [0], [1], [0, 0, 1, 1], [], []>} : vector<16x40xbf16>, vector<40x42xbf16>, vector<16x42xf32> -> vector<16x42xf32>
    %31 = arith.addf %22, %30 : vector<16x42xf32>
    %c0_24 = arith.constant 0 : index
    %c0_25 = arith.constant 0 : index
    %32 = vector.load %arg7[%c0_24, %c0_25] : memref<1x42xf32, #tpu.memory_space<vmem>>, vector<1x42xf32>
    %33 = vector.broadcast %32 : vector<1x42xf32> to vector<16x42xf32>
    %34 = arith.addf %31, %33 : vector<16x42xf32>
    %35 = vector.extract_strided_slice %34 {offsets = [0, 0], sizes = [16, 14], strides = [1, 1]} : vector<16x42xf32> to vector<16x14xf32>
    %36 = vector.extract_strided_slice %34 {offsets = [0, 14], sizes = [16, 14], strides = [1, 1]} : vector<16x42xf32> to vector<16x14xf32>
    %37 = vector.extract_strided_slice %34 {offsets = [0, 28], sizes = [16, 14], strides = [1, 1]} : vector<16x42xf32> to vector<16x14xf32>
    %38 = arith.maximumf %35, %36 : vector<16x14xf32>
    %39 = arith.maximumf %38, %37 : vector<16x14xf32>
    %40 = arith.subf %35, %39 : vector<16x14xf32>
    %41 = math.exp %40 : vector<16x14xf32>
    %42 = arith.subf %36, %39 : vector<16x14xf32>
    %43 = math.exp %42 : vector<16x14xf32>
    %44 = arith.subf %37, %39 : vector<16x14xf32>
    %45 = math.exp %44 : vector<16x14xf32>
    %46 = arith.addf %41, %43 : vector<16x14xf32>
    %47 = arith.addf %46, %45 : vector<16x14xf32>
    %48 = tpu.reciprocal %47 {approx = true} : vector<16x14xf32> -> vector<16x14xf32>
    %49 = arith.mulf %41, %48 : vector<16x14xf32>
    %50 = arith.truncf %49 : vector<16x14xf32> to vector<16x14xbf16>
    %c0_26 = arith.constant 0 : index
    %c0_27 = arith.constant 0 : index
    %51 = vector.load %arg8[%c0_26, %c0_27] : memref<14x112xbf16, #tpu.memory_space<vmem>>, vector<14x112xbf16>
    %cst_28 = arith.constant dense<0.000000e+00> : vector<16x112xf32>
    %52 = tpu.matmul %50, %51, %cst_28 {dimension_numbers = #tpu.dot_dimension_numbers<[1], [0], [0], [1], [0, 0, 1, 1], [], []>} : vector<16x14xbf16>, vector<14x112xbf16>, vector<16x112xf32> -> vector<16x112xf32>
    %c0_29 = arith.constant 0 : index
    %c0_30 = arith.constant 0 : index
    %c0_31 = arith.constant 0 : index
    %53 = vector.load %arg3[%c0_29, %c0_30, %c0_31] : memref<3x16x112xbf16, #tpu.memory_space<vmem>>, vector<1x16x112xbf16>
    %54 = vector.shape_cast %53 : vector<1x16x112xbf16> to vector<16x112xbf16>
    %55 = arith.extf %54 : vector<16x112xbf16> to vector<16x112xf32>
    %56 = arith.mulf %52, %55 : vector<16x112xf32>
    %57 = arith.mulf %43, %48 : vector<16x14xf32>
    %58 = arith.truncf %57 : vector<16x14xf32> to vector<16x14xbf16>
    %c0_32 = arith.constant 0 : index
    %c0_33 = arith.constant 0 : index
    %59 = vector.load %arg8[%c0_32, %c0_33] : memref<14x112xbf16, #tpu.memory_space<vmem>>, vector<14x112xbf16>
    %cst_34 = arith.constant dense<0.000000e+00> : vector<16x112xf32>
    %60 = tpu.matmul %58, %59, %cst_34 {dimension_numbers = #tpu.dot_dimension_numbers<[1], [0], [0], [1], [0, 0, 1, 1], [], []>} : vector<16x14xbf16>, vector<14x112xbf16>, vector<16x112xf32> -> vector<16x112xf32>
    %c1_35 = arith.constant 1 : index
    %c0_36 = arith.constant 0 : index
    %c0_37 = arith.constant 0 : index
    %61 = vector.load %arg3[%c1_35, %c0_36, %c0_37] : memref<3x16x112xbf16, #tpu.memory_space<vmem>>, vector<1x16x112xbf16>
    %62 = vector.shape_cast %61 : vector<1x16x112xbf16> to vector<16x112xbf16>
    %63 = arith.extf %62 : vector<16x112xbf16> to vector<16x112xf32>
    %64 = arith.mulf %60, %63 : vector<16x112xf32>
    %65 = arith.addf %56, %64 : vector<16x112xf32>
    %66 = arith.mulf %45, %48 : vector<16x14xf32>
    %67 = arith.truncf %66 : vector<16x14xf32> to vector<16x14xbf16>
    %c0_38 = arith.constant 0 : index
    %c0_39 = arith.constant 0 : index
    %68 = vector.load %arg8[%c0_38, %c0_39] : memref<14x112xbf16, #tpu.memory_space<vmem>>, vector<14x112xbf16>
    %cst_40 = arith.constant dense<0.000000e+00> : vector<16x112xf32>
    %69 = tpu.matmul %67, %68, %cst_40 {dimension_numbers = #tpu.dot_dimension_numbers<[1], [0], [0], [1], [0, 0, 1, 1], [], []>} : vector<16x14xbf16>, vector<14x112xbf16>, vector<16x112xf32> -> vector<16x112xf32>
    %c2_41 = arith.constant 2 : index
    %c0_42 = arith.constant 0 : index
    %c0_43 = arith.constant 0 : index
    %70 = vector.load %arg3[%c2_41, %c0_42, %c0_43] : memref<3x16x112xbf16, #tpu.memory_space<vmem>>, vector<1x16x112xbf16>
    %71 = vector.shape_cast %70 : vector<1x16x112xbf16> to vector<16x112xbf16>
    %72 = arith.extf %71 : vector<16x112xbf16> to vector<16x112xf32>
    %73 = arith.mulf %69, %72 : vector<16x112xf32>
    %74 = arith.addf %65, %73 : vector<16x112xf32>
    %75 = arith.truncf %74 : vector<16x112xf32> to vector<16x112xbf16>
    %c0_44 = arith.constant 0 : index
    %c0_45 = arith.constant 0 : index
    %76 = vector.load %arg9[%c0_44, %c0_45] : memref<112x128xbf16, #tpu.memory_space<vmem>>, vector<112x128xbf16>
    %cst_46 = arith.constant dense<0.000000e+00> : vector<16x128xf32>
    %77 = tpu.matmul %75, %76, %cst_46 {dimension_numbers = #tpu.dot_dimension_numbers<[1], [0], [0], [1], [0, 0, 1, 1], [], []>} : vector<16x112xbf16>, vector<112x128xbf16>, vector<16x128xf32> -> vector<16x128xf32>
    %c0_47 = arith.constant 0 : index
    %c0_48 = arith.constant 0 : index
    %78 = vector.load %arg10[%c0_47, %c0_48] : memref<1x128xf32, #tpu.memory_space<vmem>>, vector<1x128xf32>
    %79 = vector.broadcast %78 : vector<1x128xf32> to vector<16x128xf32>
    %80 = arith.addf %77, %79 : vector<16x128xf32>
    %81 = arith.truncf %80 : vector<16x128xf32> to vector<16x128xbf16>
    %c0_49 = arith.constant 0 : index
    %c0_50 = arith.constant 0 : index
    %82 = vector.load %arg11[%c0_49, %c0_50] : memref<16x128xbf16, #tpu.memory_space<vmem>>, vector<16x128xbf16>
    tpu.vector_store %arg11[%c0_49, %c0_50], %81 {strides = array<i32>} : memref<16x128xbf16, #tpu.memory_space<vmem>>, vector<16x128xbf16>,
    return
  }
  func.func @transform_0(%arg0: i32) -> (i32, i32) {
    %c0_i32 = arith.constant 0 : i32
    %c0_i32_0 = arith.constant 0 : i32
    return %arg0, %c0_i32 : i32, i32
  }
  func.func @transform_1(%arg0: i32) -> (i32, i32, i32) {
    %c0_i32 = arith.constant 0 : i32
    %c0_i32_0 = arith.constant 0 : i32
    %c0_i32_1 = arith.constant 0 : i32
    return %c0_i32, %arg0, %c0_i32_0 : i32, i32, i32
  }
  func.func @transform_2(%arg0: i32) -> (i32, i32, i32) {
    %c0_i32 = arith.constant 0 : i32
    %c0_i32_0 = arith.constant 0 : i32
    %c0_i32_1 = arith.constant 0 : i32
    return %c0_i32, %arg0, %c0_i32_0 : i32, i32, i32
  }
  func.func @transform_3(%arg0: i32) -> (i32, i32) {
    %c0_i32 = arith.constant 0 : i32
    %c0_i32_0 = arith.constant 0 : i32
    %c0_i32_1 = arith.constant 0 : i32
    return %c0_i32, %c0_i32_0 : i32, i32
  }
  func.func @transform_4(%arg0: i32) -> (i32, i32) {
    %c0_i32 = arith.constant 0 : i32
    %c0_i32_0 = arith.constant 0 : i32
    %c0_i32_1 = arith.constant 0 : i32
    return %c0_i32, %c0_i32_0 : i32, i32
  }
  func.func @transform_5(%arg0: i32) -> (i32, i32, i32) {
    %c0_i32 = arith.constant 0 : i32
    %c0_i32_0 = arith.constant 0 : i32
    %c0_i32_1 = arith.constant 0 : i32
    %c0_i32_2 = arith.constant 0 : i32
    return %c0_i32, %c0_i32_0, %c0_i32_1 : i32, i32, i32
  }
  func.func @transform_6(%arg0: i32) -> (i32, i32) {
    %c0_i32 = arith.constant 0 : i32
    %c0_i32_0 = arith.constant 0 : i32
    %c0_i32_1 = arith.constant 0 : i32
    return %c0_i32, %c0_i32_0 : i32, i32
  }
  func.func @transform_7(%arg0: i32) -> (i32, i32) {
    %c0_i32 = arith.constant 0 : i32
    %c0_i32_0 = arith.constant 0 : i32
    %c0_i32_1 = arith.constant 0 : i32
    return %c0_i32, %c0_i32_0 : i32, i32
  }
  func.func @transform_8(%arg0: i32) -> (i32, i32) {
    %c0_i32 = arith.constant 0 : i32
    %c0_i32_0 = arith.constant 0 : i32
    %c0_i32_1 = arith.constant 0 : i32
    return %c0_i32, %c0_i32_0 : i32, i32
  }
  func.func @transform_9(%arg0: i32) -> (i32, i32) {
    %c0_i32 = arith.constant 0 : i32
    %c0_i32_0 = arith.constant 0 : i32
    %c0_i32_1 = arith.constant 0 : i32
    return %c0_i32, %c0_i32_0 : i32, i32
  }
  func.func @transform_10(%arg0: i32) -> (i32, i32) {
    %c0_i32 = arith.constant 0 : i32
    %c0_i32_0 = arith.constant 0 : i32
    return %arg0, %c0_i32 : i32, i32
  }
}

</mosaic_0001>

<llo_original>
// kernel: tpu_custom_call.1
$region0: #{tpu_custom_call.1}
  #allocation0 [shape = 'u32[]', space=smem, size = 0x4, offset = 0x4, fixed_abs, tag = 'smem constant byte address 0x4 - core index']
  #allocation1 [shape = 'u32[72,128]{1,0:T(1,128)}', space=vmem, size = 0x9000, scoped, tag = 'internal scratch']
  #allocation15 [shape = 's32[]', space=sflag, size = 0x4, offset = 0, fixed_abs, tag = 'sflag constant byte address 0x0 - dummy sync flag']
  #allocation17 [shape = 's32[]', space=sflag, size = 0x4, offset = 0, fixed_abs, tag = 'sflag constant byte address 0x0 - dummy sync flag']
  %s0 = inlined_call_operand.hbm [shape: bf16[32,40], index: 0, kind: input, shape index: {}]
  %s1 = inlined_call_operand.hbm [shape: bf16[3,32,40], index: 1, kind: input, shape index: {}]
  %s2 = inlined_call_operand.hbm [shape: bf16[3,32,112], index: 2, kind: input, shape index: {}]
  %s3 = inlined_call_operand.hbm [shape: bf16[40,40], index: 3, kind: input, shape index: {}]
  %s4 = inlined_call_operand.vmem [shape: f32[1,40], index: 4, kind: input, shape index: {}]
  %s5 = inlined_call_operand.hbm [shape: bf16[3,40,42], index: 5, kind: input, shape index: {}]
  %s6 = inlined_call_operand.vmem [shape: f32[1,42], index: 6, kind: input, shape index: {}]
  %s7 = inlined_call_operand.hbm [shape: bf16[14,112], index: 7, kind: input, shape index: {}]
  %s8 = inlined_call_operand.hbm [shape: bf16[112,128], index: 8, kind: input, shape index: {}]
  %s9 = inlined_call_operand.vmem [shape: f32[1,128], index: 9, kind: input, shape index: {}]
  %s10 = inlined_call_operand.hbm [shape: bf16[32,128], index: 10, kind: output, shape index: {}]
  %s11 = sld [smem:[#allocation0]]
  $region101: #{tpu_custom_call.1} parent=0
    _
  %s13 = ssub.s32 1, %s11
  %s14 = scalar_select 0, %s13, %s11
  $region1: #{tpu_custom_call.1} parent=0
    #allocation2 [shape = 'u8[8192]{0}', space=vmem, size = 0x2000, scoped, tag = 'input window, operand 0']
    #allocation3 [shape = 's32[2]{0}', space=sflag, size = 0x8, scoped, tag = 'scoped memory for tpu_custom_call.1']
    #allocation4 [shape = 's32[2]{0}', space=sflag, size = 0x8, scoped, tag = 'scoped memory for tpu_custom_call.1']
    #allocation5 [shape = 'u8[24576]{0}', space=vmem, size = 0x6000, scoped, tag = 'input window, operand 1']
    #allocation6 [shape = 's32[2]{0}', space=sflag, size = 0x8, scoped, tag = 'scoped memory for tpu_custom_call.1']
    #allocation7 [shape = 'u8[24576]{0}', space=vmem, size = 0x6000, scoped, tag = 'input window, operand 2']
    #allocation8 [shape = 'u8[10240]{0}', space=vmem, size = 0x2800, scoped, tag = 'input window, operand 3, single buffered']
    #allocation9 [shape = 's32[1]{0}', space=sflag, size = 0x4, scoped, tag = 'scoped memory for tpu_custom_call.1']
    #allocation10 [shape = 'u8[30720]{0}', space=vmem, size = 0x7800, scoped, tag = 'input window, operand 5, single buffered']
    #allocation11 [shape = 'u8[4096]{0}', space=vmem, size = 0x1000, scoped, tag = 'input window, operand 7, single buffered']
    #allocation12 [shape = 's32[1]{0}', space=sflag, size = 0x4, scoped, tag = 'scoped memory for tpu_custom_call.1']
    #allocation13 [shape = 'u8[28672]{0}', space=vmem, size = 0x7000, scoped, tag = 'input window, operand 8, single buffered']
    #allocation14 [shape = 'u8[8192]{0}', space=vmem, size = 0x2000, scoped, tag = 'output window, operand 0']
    %15 = vsyncpa [#allocation3], 0
    %s16 = scalar_lea.sflag [#allocation3], 1
    %17 = vsyncpa %s16, 0
    %18 = vsyncpa [#allocation6], 0
    %s19 = scalar_lea.sflag [#allocation6], 1
    %20 = vsyncpa %s19, 0
    %21 = vsyncpa [#allocation9], 0
    %22 = vsyncpa [#allocation12], 0
    %23 = vsyncpa [#allocation4], 0
    %s24 = scalar_lea.sflag [#allocation4], 1
    %25 = vsyncpa %s24, 0
    loop: start=0, step=1, limit=4
    $region2: #{tpu_custom_call.1} parent=1 // loop_pre_header
      _
    $region3: #{tpu_custom_call.1} parent=1 // loop_header
      %s27 = sphi 0, %s31
      %p28 = scmp.ge.s32.totalorder %s27, 4
      %s37 = sphi 0, %s39
      %s40 = sphi 0, %s37
      %s41 = sphi 0, %s40
      %s57 = sphi 0, %s41
      %s63 = sphi 0, %s65
      %s66 = sphi 0, %s63
      %s67 = sphi 0, %s66
      %s83 = sphi 0, %s67
      %s89 = sphi 0, %s91
      %s92 = sphi 0, %s89
      %s93 = sphi 0, %s92
      %s109 = sphi 0, %s93
      %s113 = sphi 0, %s113
      %s115 = sphi 0, %s113
      %s116 = sphi 0, %s115
      %s130 = sphi 0, %s116
      %s134 = sphi 0, %s134
      %s136 = sphi 0, %s134
      %s137 = sphi 0, %s136
      %s151 = sphi 0, %s137
      %s155 = sphi 0, %s155
      %s157 = sphi 0, %s155
      %s158 = sphi 0, %s157
      %s172 = sphi 0, %s158
      %s176 = sphi 0, %s176
      %s178 = sphi 0, %s176
      %s179 = sphi 0, %s178
      %s193 = sphi 0, %s179
      %s197 = sphi 0, %s197
      %s199 = sphi 0, %s197
      %s200 = sphi 0, %s199
      %s214 = sphi 0, %s200
      %s218 = sphi 0, %s218
      %s220 = sphi 0, %s218
      %s221 = sphi 0, %s220
      %s235 = sphi 0, %s221
      %s239 = sphi 0, %s239
      %s241 = sphi 0, %s239
      %s242 = sphi 0, %s241
      %s256 = sphi 0, %s242
      %s262 = sphi 0, %s264
      %s265 = sphi 0, %s262
      %s266 = sphi 0, %s265
      %s282 = sphi 0, %s266
    $region4: #{tpu_custom_call.1} parent=1 // loop_header_branch
      %30 = sbr.rel (%p28) target = $region8
    $region5: #{tpu_custom_call.1} parent=1 // loop_body
      %s32 = ssub.s32 %s27, 1
      %s33 = ssub.s32 %s27, 2
      %s34 = sadd.s32 %s27, 1
      %s35 = ssub.s32 %s27, %s34
      %p36 = scmp.eq.s32.totalorder %s35, 0
      %s38 = sadd.s32 %s37, 1
      %s39 = scalar_select %p36, %s37, %s38
      %p42 = pneg %p36
      %p43 = scmp.eq.s32.totalorder %s27, 1
      %p44 = por %p42, %p43
      %p45 = scmp.ne.s32.totalorder %s37, %s40
      %p46 = scmp.eq.s32.totalorder %s27, 0
      %p47 = por %p45, %p46
      %p48 = scmp.ne.s32.totalorder %s37, %s40
      %p49 = scmp.eq.s32.totalorder %s32, 1
      %p50 = por %p48, %p49
      %p51 = scmp.ne.s32.totalorder %s40, %s41
      %p52 = scmp.eq.s32.totalorder %s32, 0
      %p53 = por %p51, %p52
      %p54 = scmp.ne.s32.totalorder %s40, %s41
      %p55 = scmp.eq.s32.totalorder %s33, 1
      %p56 = por %p54, %p55
      %p58 = scmp.ne.s32.totalorder %s41, %s57
      %p59 = scmp.eq.s32.totalorder %s33, 0
      %p60 = por %p58, %p59
      %s61 = ssub.s32 %s27, %s34
      %p62 = scmp.eq.s32.totalorder %s61, 0
      %s64 = sadd.s32 %s63, 1
      %s65 = scalar_select %p62, %s63, %s64
      %p68 = pneg %p62
      %p69 = scmp.eq.s32.totalorder %s27, 1
      %p70 = por %p68, %p69
      %p71 = scmp.ne.s32.totalorder %s63, %s66
      %p72 = scmp.eq.s32.totalorder %s27, 0
      %p73 = por %p71, %p72
      %p74 = scmp.ne.s32.totalorder %s63, %s66
      %p75 = scmp.eq.s32.totalorder %s32, 1
      %p76 = por %p74, %p75
      %p77 = scmp.ne.s32.totalorder %s66, %s67
      %p78 = scmp.eq.s32.totalorder %s32, 0
      %p79 = por %p77, %p78
      %p80 = scmp.ne.s32.totalorder %s66, %s67
      %p81 = scmp.eq.s32.totalorder %s33, 1
      %p82 = por %p80, %p81
      %p84 = scmp.ne.s32.totalorder %s67, %s83
      %p85 = scmp.eq.s32.totalorder %s33, 0
      %p86 = por %p84, %p85
      %s87 = ssub.s32 %s27, %s34
      %p88 = scmp.eq.s32.totalorder %s87, 0
      %s90 = sadd.s32 %s89, 1
      %s91 = scalar_select %p88, %s89, %s90
      %p94 = pneg %p88
      %p95 = scmp.eq.s32.totalorder %s27, 1
      %p96 = por %p94, %p95
      %p97 = scmp.ne.s32.totalorder %s89, %s92
      %p98 = scmp.eq.s32.totalorder %s27, 0
      %p99 = por %p97, %p98
      %p100 = scmp.ne.s32.totalorder %s89, %s92
      %p101 = scmp.eq.s32.totalorder %s32, 1
      %p102 = por %p100, %p101
      %p103 = scmp.ne.s32.totalorder %s92, %s93
      %p104 = scmp.eq.s32.totalorder %s32, 0
      %p105 = por %p103, %p104
      %p106 = scmp.ne.s32.totalorder %s92, %s93
      %p107 = scmp.eq.s32.totalorder %s33, 1
      %p108 = por %p106, %p107
      %p110 = scmp.ne.s32.totalorder %s93, %s109
      %p111 = scmp.eq.s32.totalorder %s33, 0
      %p112 = por %p110, %p111
      %s114 = sadd.s32 %s113, 1
      %p117 = scmp.eq.s32.totalorder %s27, 1
      %p118 = scmp.ne.s32.totalorder %s113, %s115
      %p119 = scmp.eq.s32.totalorder %s27, 0
      %p120 = por %p118, %p119
      %p121 = scmp.ne.s32.totalorder %s113, %s115
      %p122 = scmp.eq.s32.totalorder %s32, 1
      %p123 = por %p121, %p122
      %p124 = scmp.ne.s32.totalorder %s115, %s116
      %p125 = scmp.eq.s32.totalorder %s32, 0
      %p126 = por %p124, %p125
      %p127 = scmp.ne.s32.totalorder %s115, %s116
      %p128 = scmp.eq.s32.totalorder %s33, 1
      %p129 = por %p127, %p128
      %p131 = scmp.ne.s32.totalorder %s116, %s130
      %p132 = scmp.eq.s32.totalorder %s33, 0
      %p133 = por %p131, %p132
      %s135 = sadd.s32 %s134, 1
      %p138 = scmp.eq.s32.totalorder %s27, 1
      %p139 = scmp.ne.s32.totalorder %s134, %s136
      %p140 = scmp.eq.s32.totalorder %s27, 0
      %p141 = por %p139, %p140
      %p142 = scmp.ne.s32.totalorder %s134, %s136
      %p143 = scmp.eq.s32.totalorder %s32, 1
      %p144 = por %p142, %p143
      %p145 = scmp.ne.s32.totalorder %s136, %s137
      %p146 = scmp.eq.s32.totalorder %s32, 0
      %p147 = por %p145, %p146
      %p148 = scmp.ne.s32.totalorder %s136, %s137
      %p149 = scmp.eq.s32.totalorder %s33, 1
      %p150 = por %p148, %p149
      %p152 = scmp.ne.s32.totalorder %s137, %s151
      %p153 = scmp.eq.s32.totalorder %s33, 0
      %p154 = por %p152, %p153
      %s156 = sadd.s32 %s155, 1
      %p159 = scmp.eq.s32.totalorder %s27, 1
      %p160 = scmp.ne.s32.totalorder %s155, %s157
      %p161 = scmp.eq.s32.totalorder %s27, 0
      %p162 = por %p160, %p161
      %p163 = scmp.ne.s32.totalorder %s155, %s157
      %p164 = scmp.eq.s32.totalorder %s32, 1
      %p165 = por %p163, %p164
      %p166 = scmp.ne.s32.totalorder %s157, %s158
      %p167 = scmp.eq.s32.totalorder %s32, 0
      %p168 = por %p166, %p167
      %p169 = scmp.ne.s32.totalorder %s157, %s158
      %p170 = scmp.eq.s32.totalorder %s33, 1
      %p171 = por %p169, %p170
      %p173 = scmp.ne.s32.totalorder %s158, %s172
      %p174 = scmp.eq.s32.totalorder %s33, 0
      %p175 = por %p173, %p174
      %s177 = sadd.s32 %s176, 1
      %p180 = scmp.eq.s32.totalorder %s27, 1
      %p181 = scmp.ne.s32.totalorder %s176, %s178
      %p182 = scmp.eq.s32.totalorder %s27, 0
      %p183 = por %p181, %p182
      %p184 = scmp.ne.s32.totalorder %s176, %s178
      %p185 = scmp.eq.s32.totalorder %s32, 1
      %p186 = por %p184, %p185
      %p187 = scmp.ne.s32.totalorder %s178, %s179
      %p188 = scmp.eq.s32.totalorder %s32, 0
      %p189 = por %p187, %p188
      %p190 = scmp.ne.s32.totalorder %s178, %s179
      %p191 = scmp.eq.s32.totalorder %s33, 1
      %p192 = por %p190, %p191
      %p194 = scmp.ne.s32.totalorder %s179, %s193
      %p195 = scmp.eq.s32.totalorder %s33, 0
      %p196 = por %p194, %p195
      %s198 = sadd.s32 %s197, 1
      %p201 = scmp.eq.s32.totalorder %s27, 1
      %p202 = scmp.ne.s32.totalorder %s197, %s199
      %p203 = scmp.eq.s32.totalorder %s27, 0
      %p204 = por %p202, %p203
      %p205 = scmp.ne.s32.totalorder %s197, %s199
      %p206 = scmp.eq.s32.totalorder %s32, 1
      %p207 = por %p205, %p206
      %p208 = scmp.ne.s32.totalorder %s199, %s200
      %p209 = scmp.eq.s32.totalorder %s32, 0
      %p210 = por %p208, %p209
      %p211 = scmp.ne.s32.totalorder %s199, %s200
      %p212 = scmp.eq.s32.totalorder %s33, 1
      %p213 = por %p211, %p212
      %p215 = scmp.ne.s32.totalorder %s200, %s214
      %p216 = scmp.eq.s32.totalorder %s33, 0
      %p217 = por %p215, %p216
      %s219 = sadd.s32 %s218, 1
      %p222 = scmp.eq.s32.totalorder %s27, 1
      %p223 = scmp.ne.s32.totalorder %s218, %s220
      %p224 = scmp.eq.s32.totalorder %s27, 0
      %p225 = por %p223, %p224
      %p226 = scmp.ne.s32.totalorder %s218, %s220
      %p227 = scmp.eq.s32.totalorder %s32, 1
      %p228 = por %p226, %p227
      %p229 = scmp.ne.s32.totalorder %s220, %s221
      %p230 = scmp.eq.s32.totalorder %s32, 0
      %p231 = por %p229, %p230
      %p232 = scmp.ne.s32.totalorder %s220, %s221
      %p233 = scmp.eq.s32.totalorder %s33, 1
      %p234 = por %p232, %p233
      %p236 = scmp.ne.s32.totalorder %s221, %s235
      %p237 = scmp.eq.s32.totalorder %s33, 0
      %p238 = por %p236, %p237
      %s240 = sadd.s32 %s239, 1
      %p243 = scmp.eq.s32.totalorder %s27, 1
      %p244 = scmp.ne.s32.totalorder %s239, %s241
      %p245 = scmp.eq.s32.totalorder %s27, 0
      %p246 = por %p244, %p245
      %p247 = scmp.ne.s32.totalorder %s239, %s241
      %p248 = scmp.eq.s32.totalorder %s32, 1
      %p249 = por %p247, %p248
      %p250 = scmp.ne.s32.totalorder %s241, %s242
      %p251 = scmp.eq.s32.totalorder %s32, 0
      %p252 = por %p250, %p251
      %p253 = scmp.ne.s32.totalorder %s241, %s242
      %p254 = scmp.eq.s32.totalorder %s33, 1
      %p255 = por %p253, %p254
      %p257 = scmp.ne.s32.totalorder %s242, %s256
      %p258 = scmp.eq.s32.totalorder %s33, 0
      %p259 = por %p257, %p258
      %s260 = ssub.s32 %s27, %s34
      %p261 = scmp.eq.s32.totalorder %s260, 0
      %s263 = sadd.s32 %s262, 1
      %s264 = scalar_select %p261, %s262, %s263
      %p267 = pneg %p261
      %p268 = scmp.eq.s32.totalorder %s27, 1
      %p269 = por %p267, %p268
      %p270 = scmp.ne.s32.totalorder %s262, %s265
      %p271 = scmp.eq.s32.totalorder %s27, 0
      %p272 = por %p270, %p271
      %p273 = scmp.ne.s32.totalorder %s262, %s265
      %p274 = scmp.eq.s32.totalorder %s32, 1
      %p275 = por %p273, %p274
      %p276 = scmp.ne.s32.totalorder %s265, %s266
      %p277 = scmp.eq.s32.totalorder %s32, 0
      %p278 = por %p276, %p277
      %p279 = scmp.ne.s32.totalorder %s265, %s266
      %p280 = scmp.eq.s32.totalorder %s33, 1
      %p281 = por %p279, %p280
      %p283 = scmp.ne.s32.totalorder %s266, %s282
      %p284 = scmp.eq.s32.totalorder %s33, 0
      %p285 = por %p283, %p284
      %p286 = scmp.le.s32.totalorder 1, %s27
      %p287 = scmp.lt.s32.totalorder %s27, 3
      %p288 = pnand %p286, %p287
      %p289 = pneg %p288
      // Predicated region
      $region9: #{tpu_custom_call.1} parent=5 // pred_check
        _
      $region10: #{tpu_custom_call.1} parent=5 // pred_check_branch
        %291 = sbr.rel (%p288) target = $region12
      $region11: #{tpu_custom_call.1} parent=5 // pred_region
        %s292 = ssub.s32 %s27, 1
        // Predicated region
        $region13: #{tpu_custom_call.1} parent=11 // pred_check
          %p293 = pneg %p126
        $region14: #{tpu_custom_call.1} parent=11 // pred_check_branch
          %295 = sbr.rel (%p293) target = $region16
        $region15: #{tpu_custom_call.1} parent=11 // pred_region
          %297 = vsyncadd [#allocation9], 0
          %s298 = sshll.u32 %s3, 4
          %s299 = int_to_ptr.hbm [resolvable:$true] %s298
          %s300 = sshll.u32 [#allocation8], 4
          %s301 = int_to_ptr.vmem [resolvable:$true] %s300
          %306 = dma.hbm_to_vmem [thread:$0]  %s299, 320, %s301, [#allocation9], 64, 64, 4
        $region16: #{tpu_custom_call.1} parent=11 // pred_fallthru
          _
        // Predicated region
        $region17: #{tpu_custom_call.1} parent=11 // pred_check
          %p307 = pneg %p147
        $region18: #{tpu_custom_call.1} parent=11 // pred_check_branch
          %309 = sbr.rel (%p307) target = $region20
        $region19: #{tpu_custom_call.1} parent=11 // pred_region
          _
        $region20: #{tpu_custom_call.1} parent=11 // pred_fallthru
          _
        // Predicated region
        $region21: #{tpu_custom_call.1} parent=11 // pred_check
          %p310 = pneg %p168
        $region22: #{tpu_custom_call.1} parent=11 // pred_check_branch
          %312 = sbr.rel (%p310) target = $region24
        $region23: #{tpu_custom_call.1} parent=11 // pred_region
          %314 = vsyncadd [#allocation9], 0
          %s315 = sshll.u32 %s5, 4
          %s316 = int_to_ptr.hbm [resolvable:$true] %s315
          %s317 = sshll.u32 [#allocation10], 4
          %s318 = int_to_ptr.vmem [resolvable:$true] %s317
          %323 = dma.hbm_to_vmem [thread:$0]  %s316, 960, %s318, [#allocation9], 64, 64, 4
        $region24: #{tpu_custom_call.1} parent=11 // pred_fallthru
          _
        // Predicated region
        $region25: #{tpu_custom_call.1} parent=11 // pred_check
          %p324 = pneg %p189
        $region26: #{tpu_custom_call.1} parent=11 // pred_check_branch
          %326 = sbr.rel (%p324) target = $region28
        $region27: #{tpu_custom_call.1} parent=11 // pred_region
          _
        $region28: #{tpu_custom_call.1} parent=11 // pred_fallthru
          _
        // Predicated region
        $region29: #{tpu_custom_call.1} parent=11 // pred_check
          %p327 = pneg %p210
        $region30: #{tpu_custom_call.1} parent=11 // pred_check_branch
          %329 = sbr.rel (%p327) target = $region32
        $region31: #{tpu_custom_call.1} parent=11 // pred_region
          %331 = vsyncadd [#allocation12], 0
          %s332 = sshll.u32 %s7, 4
          %s333 = int_to_ptr.hbm [resolvable:$true] %s332
          %s334 = sshll.u32 [#allocation11], 4
          %s335 = int_to_ptr.vmem [resolvable:$true] %s334
          %340 = dma.hbm_to_vmem [thread:$0]  %s333, 128, %s335, [#allocation12], 64, 64, 4
        $region32: #{tpu_custom_call.1} parent=11 // pred_fallthru
          _
        // Predicated region
        $region33: #{tpu_custom_call.1} parent=11 // pred_check
          %p341 = pneg %p231
        $region34: #{tpu_custom_call.1} parent=11 // pred_check_branch
          %343 = sbr.rel (%p341) target = $region36
        $region35: #{tpu_custom_call.1} parent=11 // pred_region
          %345 = vsyncadd [#allocation12], 0
          %s346 = sshll.u32 %s8, 4
          %s347 = int_to_ptr.hbm [resolvable:$true] %s346
          %s348 = sshll.u32 [#allocation13], 4
          %s349 = int_to_ptr.vmem [resolvable:$true] %s348
          %354 = dma.hbm_to_vmem [thread:$0]  %s347, 896, %s349, [#allocation12], 64, 64, 4
        $region36: #{tpu_custom_call.1} parent=11 // pred_fallthru
          _
        // Predicated region
        $region37: #{tpu_custom_call.1} parent=11 // pred_check
          %p355 = pneg %p252
        $region38: #{tpu_custom_call.1} parent=11 // pred_check_branch
          %357 = sbr.rel (%p355) target = $region40
        $region39: #{tpu_custom_call.1} parent=11 // pred_region
          _
        $region40: #{tpu_custom_call.1} parent=11 // pred_fallthru
          _
      $region12: #{tpu_custom_call.1} parent=5 // pred_fallthru
        _
      %p358 = scmp.lt.s32.totalorder %s27, 2
      // Predicated region
      $region41: #{tpu_custom_call.1} parent=5 // pred_check
        %p359 = pneg %p358
      $region42: #{tpu_custom_call.1} parent=5 // pred_check_branch
        %361 = sbr.rel (%p359) target = $region44
      $region43: #{tpu_custom_call.1} parent=5 // pred_region
        // Predicated region
        $region45: #{tpu_custom_call.1} parent=43 // pred_check
          %p362 = pneg %p47
        $region46: #{tpu_custom_call.1} parent=43 // pred_check_branch
          %364 = sbr.rel (%p362) target = $region48
        $region47: #{tpu_custom_call.1} parent=43 // pred_region
          %s365 = sand.u32 %s37, 1
          %s366 = scalar_lea.sflag [#allocation3], %s365
          %s367 = sand.u32 %s37, 1
          %s368 = smul.addr %s367, 8
          %s369 = scalar_lea.vmem [#allocation2], %s368
          %s370 = smul.u32 2, %s27
          %372 = vsyncadd %s366, 0
          %s373 = smul.addr %s370, 4
          %s374 = scalar_lea.hbm %s0, %s373
          %s375 = sshll.u32 %s374, 4
          %s376 = int_to_ptr.hbm [resolvable:$true] %s375
          %s377 = sshll.u32 %s369, 4
          %s378 = int_to_ptr.vmem [resolvable:$true] %s377
          %383 = dma.hbm_to_vmem [thread:$0]  %s376, 128, %s378, %s366, 64, 64, 4
        $region48: #{tpu_custom_call.1} parent=43 // pred_fallthru
          _
        // Predicated region
        $region49: #{tpu_custom_call.1} parent=43 // pred_check
          %p384 = pneg %p73
        $region50: #{tpu_custom_call.1} parent=43 // pred_check_branch
          %386 = sbr.rel (%p384) target = $region52
        $region51: #{tpu_custom_call.1} parent=43 // pred_region
          #allocation16 [shape = 'u32[6]{0}', space=smem, size = 0x18, scoped, tag = 'DMA stride descriptor']
          %s387 = sand.u32 %s27, 1
          %s388 = scalar_lea.sflag [#allocation6], %s387
          %s389 = sand.u32 %s63, 1
          %s390 = smul.addr %s389, 24
          %s391 = scalar_lea.vmem [#allocation5], %s390
          %s392 = smul.u32 2, %s27
          %394 = vsyncadd %s388, 0
          %s395 = smul.addr %s392, 4
          %s396 = scalar_lea.hbm %s1, %s395
          %s398 = sshll.u32 1, 14
          %s399 = sxor.u32 4294967295, %s398
          %s401 = sld [smem:[#allocation0]]
          %s402 = sadd.s32 2, %s401
          %s404 = sshll.u32 7, 26
          %s405 = sxor.u32 4294967295, %s404
          %s406 = sand.u32 0, %s405
          %s407 = sshll.u32 %s402, 26
          %s408 = sor.u32 %s406, %s407
          %s409 = sshll.u32 %s396, 4
          %s410 = int_to_ptr.hbm [resolvable:$true] %s409
          %s411 = sshll.u32 %s391, 4
          %s412 = int_to_ptr.vmem [resolvable:$true] %s411
          %418 = sst [smem:[#allocation16]] 256
          %s419 = scalar_lea.smem [#allocation16], 1
          %420 = sst [smem:[%s419]] 128
          %s421 = scalar_lea.smem [#allocation16], 2
          %422 = sst [smem:[%s421]] 2
          %s423 = scalar_lea.smem [#allocation16], 3
          %424 = sst [smem:[%s423]] 64
          %s425 = scalar_lea.smem [#allocation16], 4
          %426 = sst [smem:[%s425]] 64
          %s427 = scalar_lea.smem [#allocation16], 5
          %428 = sst [smem:[%s427]] 4
          %430 = dma.general %s410, 384, %s412, %s388, [#allocation15], [#allocation16], %s408, 0
        $region52: #{tpu_custom_call.1} parent=43 // pred_fallthru
          _
        // Predicated region
        $region53: #{tpu_custom_call.1} parent=43 // pred_check
          %p431 = pneg %p99
        $region54: #{tpu_custom_call.1} parent=43 // pred_check_branch
          %433 = sbr.rel (%p431) target = $region56
        $region55: #{tpu_custom_call.1} parent=43 // pred_region
          #allocation18 [shape = 'u32[6]{0}', space=smem, size = 0x18, scoped, tag = 'DMA stride descriptor']
          %s434 = sand.u32 %s27, 1
          %s435 = scalar_lea.sflag [#allocation6], %s434
          %s436 = sand.u32 %s89, 1
          %s437 = smul.addr %s436, 24
          %s438 = scalar_lea.vmem [#allocation7], %s437
          %s439 = smul.u32 2, %s27
          %441 = vsyncadd %s435, 0
          %s442 = smul.addr %s439, 4
          %s443 = scalar_lea.hbm %s2, %s442
          %s445 = sshll.u32 1, 14
          %s446 = sxor.u32 4294967295, %s445
          %s448 = sld [smem:[#allocation0]]
          %s449 = sadd.s32 2, %s448
          %s451 = sshll.u32 7, 26
          %s452 = sxor.u32 4294967295, %s451
          %s453 = sand.u32 0, %s452
          %s454 = sshll.u32 %s449, 26
          %s455 = sor.u32 %s453, %s454
          %s456 = sshll.u32 %s443, 4
          %s457 = int_to_ptr.hbm [resolvable:$true] %s456
          %s458 = sshll.u32 %s438, 4
          %s459 = int_to_ptr.vmem [resolvable:$true] %s458
          %465 = sst [smem:[#allocation18]] 256
          %s466 = scalar_lea.smem [#allocation18], 1
          %467 = sst [smem:[%s466]] 128
          %s468 = scalar_lea.smem [#allocation18], 2
          %469 = sst [smem:[%s468]] 2
          %s470 = scalar_lea.smem [#allocation18], 3
          %471 = sst [smem:[%s470]] 64
          %s472 = scalar_lea.smem [#allocation18], 4
          %473 = sst [smem:[%s472]] 64
          %s474 = scalar_lea.smem [#allocation18], 5
          %475 = sst [smem:[%s474]] 4
          %477 = dma.general %s457, 384, %s459, %s435, [#allocation17], [#allocation18], %s455, 0
        $region56: #{tpu_custom_call.1} parent=43 // pred_fallthru
          _
      $region44: #{tpu_custom_call.1} parent=5 // pred_fallthru
        _
      %p478 = scmp.le.s32.totalorder 1, %s27
      %p479 = scmp.lt.s32.totalorder %s27, 3
      %p480 = pnand %p478, %p479
      %p481 = pneg %p480
      // Predicated region
      $region57: #{tpu_custom_call.1} parent=5 // pred_check
        _
      $region58: #{tpu_custom_call.1} parent=5 // pred_check_branch
        %483 = sbr.rel (%p480) target = $region60
      $region59: #{tpu_custom_call.1} parent=5 // pred_region
        %s484 = ssub.s32 %s27, 1
        %s485 = sand.u32 %s40, 1
        %s486 = scalar_lea.sflag [#allocation3], %s485
        %s487 = sand.u32 %s40, 1
        %s488 = smul.addr %s487, 8
        %s489 = scalar_lea.vmem [#allocation2], %s488
        // Predicated region
        $region61: #{tpu_custom_call.1} parent=59 // pred_check
          %p490 = pneg %p53
        $region62: #{tpu_custom_call.1} parent=59 // pred_check_branch
          %492 = sbr.rel (%p490) target = $region64
        $region63: #{tpu_custom_call.1} parent=59 // pred_region
          %494 = dma.done %s486, 128
        $region64: #{tpu_custom_call.1} parent=59 // pred_fallthru
          _
        %s495 = sand.u32 %s32, 1
        %s496 = scalar_lea.sflag [#allocation6], %s495
        %s497 = sand.u32 %s66, 1
        %s498 = smul.addr %s497, 24
        %s499 = scalar_lea.vmem [#allocation5], %s498
        // Predicated region
        $region65: #{tpu_custom_call.1} parent=59 // pred_check
          %p500 = pneg %p79
        $region66: #{tpu_custom_call.1} parent=59 // pred_check_branch
          %502 = sbr.rel (%p500) target = $region68
        $region67: #{tpu_custom_call.1} parent=59 // pred_region
          %504 = dma.done %s496, 384
        $region68: #{tpu_custom_call.1} parent=59 // pred_fallthru
          _
        %s505 = sand.u32 %s32, 1
        %s506 = scalar_lea.sflag [#allocation6], %s505
        %s507 = sand.u32 %s92, 1
        %s508 = smul.addr %s507, 24
        %s509 = scalar_lea.vmem [#allocation7], %s508
        // Predicated region
        $region69: #{tpu_custom_call.1} parent=59 // pred_check
          %p510 = pneg %p105
        $region70: #{tpu_custom_call.1} parent=59 // pred_check_branch
          %512 = sbr.rel (%p510) target = $region72
        $region71: #{tpu_custom_call.1} parent=59 // pred_region
          %514 = dma.done %s506, 384
        $region72: #{tpu_custom_call.1} parent=59 // pred_fallthru
          _
        // Predicated region
        $region73: #{tpu_custom_call.1} parent=59 // pred_check
          %p515 = pneg %p126
        $region74: #{tpu_custom_call.1} parent=59 // pred_check_branch
          %517 = sbr.rel (%p515) target = $region76
        $region75: #{tpu_custom_call.1} parent=59 // pred_region
          %519 = dma.done [#allocation9], 320
        $region76: #{tpu_custom_call.1} parent=59 // pred_fallthru
          _
        // Predicated region
        $region77: #{tpu_custom_call.1} parent=59 // pred_check
          %p520 = pneg %p168
        $region78: #{tpu_custom_call.1} parent=59 // pred_check_branch
          %522 = sbr.rel (%p520) target = $region80
        $region79: #{tpu_custom_call.1} parent=59 // pred_region
          %524 = dma.done [#allocation9], 960
        $region80: #{tpu_custom_call.1} parent=59 // pred_fallthru
          _
        // Predicated region
        $region81: #{tpu_custom_call.1} parent=59 // pred_check
          %p525 = pneg %p210
        $region82: #{tpu_custom_call.1} parent=59 // pred_check_branch
          %527 = sbr.rel (%p525) target = $region84
        $region83: #{tpu_custom_call.1} parent=59 // pred_region
          %529 = dma.done [#allocation12], 128
        $region84: #{tpu_custom_call.1} parent=59 // pred_fallthru
          _
        // Predicated region
        $region85: #{tpu_custom_call.1} parent=59 // pred_check
          %p530 = pneg %p231
        $region86: #{tpu_custom_call.1} parent=59 // pred_check_branch
          %532 = sbr.rel (%p530) target = $region88
        $region87: #{tpu_custom_call.1} parent=59 // pred_region
          %534 = dma.done [#allocation12], 896
        $region88: #{tpu_custom_call.1} parent=59 // pred_fallthru
          _
        %s535 = sand.u32 %s40, 1
        %s536 = scalar_lea.sflag [#allocation3], %s535
        %s537 = sand.u32 %s40, 1
        %s538 = smul.addr %s537, 8
        %s539 = scalar_lea.vmem [#allocation2], %s538
        %p540 = pneg %p53
        %p541 = pneg %p50
        %s542 = sand.u32 %s32, 1
        %s543 = scalar_lea.sflag [#allocation6], %s542
        %s544 = sand.u32 %s66, 1
        %s545 = smul.addr %s544, 24
        %s546 = scalar_lea.vmem [#allocation5], %s545
        %p547 = pneg %p79
        %p548 = pneg %p76
        %s549 = sand.u32 %s32, 1
        %s550 = scalar_lea.sflag [#allocation6], %s549
        %s551 = sand.u32 %s92, 1
        %s552 = smul.addr %s551, 24
        %s553 = scalar_lea.vmem [#allocation7], %s552
        %p554 = pneg %p105
        %p555 = pneg %p102
        %p556 = pneg %p126
        %p557 = pneg %p123
        %p558 = pneg %p147
        %p559 = pneg %p144
        %p560 = pneg %p168
        %p561 = pneg %p165
        %p562 = pneg %p189
        %p563 = pneg %p186
        %p564 = pneg %p210
        %p565 = pneg %p207
        %p566 = pneg %p231
        %p567 = pneg %p228
        %p568 = pneg %p252
        %p569 = pneg %p249
        %p570 = pneg %p278
        %p571 = pneg %p275
        %s572 = sand.u32 %s265, 1
        %s573 = scalar_lea.sflag [#allocation4], %s572
        %s574 = sand.u32 %s265, 1
        %s575 = smul.addr %s574, 8
        %s576 = scalar_lea.vmem [#allocation14], %s575
        %s577 = smul.u32 2, %s32
        %s578 = smul.u32 2, %s32
        %s579 = smul.u32 2, %s32
        %s580 = smul.u32 2, %s32
        %v582 = vld [vmem:[%s489] sm:$0xf]
        %v583 = vld [vmem:[%s489 + $0x4] sm:$0xf]
        %v584 = vld [vmem:[#allocation8] sm:$0xf]
        %v585 = vld [vmem:[#allocation8 + $0x4] sm:$0xf]
        %v586 = vld [vmem:[#allocation8 + $0x8] sm:$0xf]
        %v587 = vld [vmem:[#allocation8 + $0xc] sm:$0xf]
        %v588 = vld [vmem:[#allocation8 + $0x10] sm:$0xf]
        %v589 = vld [vmem:[%s4] sm:$0x1]
        %v591 = vperm.slane %v589, 0
        %v595 = vunpack.c.l.b16 %v582
        %v596 = vunpack.c.l.b16 %v583
        %v597 = vpack.c.b16 %v596, %v595
        %v603 = vunpack.c.l.b16 %v584
        %v604 = vunpack.c.l.b16 %v585
        %v605 = vunpack.c.l.b16 %v586
        %v606 = vunpack.c.l.b16 %v587
        %v607 = vunpack.c.l.b16 %v588
        %v608 = vpack.c.b16 %v604, %v603
        %v609 = vpack.c.b16 %v606, %v605
        %v610 = vpack.c.b16 %v607, %v607
        %vm613 = vcmask 326656
        %v615 = vsel %vm613, %v597, 0
        %vm617 = vcmask 1043456
        %v619 = vsel %vm617, %v610, 0
        %621 = vmatpush.bf16.msra.mxu0 0
        %622 = vmatpush.bf16.msra.mxu0 0
        %623 = vmatpush.bf16.msra.mxu0 0
        %624 = vmatpush.bf16.msra.mxu0 0
        %625 = vmatpush.bf16.msra.mxu0 0
        %626 = vmatpush.bf16.msra.mxu0 %v619
        %627 = vmatpush.bf16.msra.mxu0 %v609
        %628 = vmatpush.bf16.msra.mxu0 %v608
        %629 = vmatmul.bf16.gmra.mxu0 %v615
        %v630 = vpop.f32.mrf.mxu0
        %v631 = vadd.f32 %v591, %v630
        %v632 = vpop.f32.mrf.mxu0
        %v633 = vadd.f32 %v591, %v632
        %634 = vdwg.mxu0
        %v635 = vld [vmem:[%s499] sm:$0xf]
        %v636 = vld [vmem:[%s499 + $0x4] sm:$0xf]
        %v637 = vunpack.c.l.bf16 %v635
        %v638 = vunpack.c.l.bf16 %v636
        %v639 = vmul.f32 %v631, %v637
        %v640 = vmul.f32 %v633, %v638
        %v641 = vpack.c.bf16 %v640, %v639
        %v642 = vld [vmem:[#allocation10] sm:$0xf]
        %v643 = vld [vmem:[#allocation10 + $0x4] sm:$0xf]
        %v644 = vld [vmem:[#allocation10 + $0x8] sm:$0xf]
        %v645 = vld [vmem:[#allocation10 + $0xc] sm:$0xf]
        %v646 = vld [vmem:[#allocation10 + $0x10] sm:$0xf]
        %s647 = scalar_lea.vmem %s499, 8 [#allocation5]
        %v648 = vld [vmem:[%s647] sm:$0xf]
        %v649 = vld [vmem:[%s647 + $0x4] sm:$0xf]
        %v650 = vunpack.c.l.bf16 %v648
        %v651 = vunpack.c.l.bf16 %v649
        %v652 = vmul.f32 %v631, %v650
        %v653 = vmul.f32 %v633, %v651
        %v654 = vpack.c.bf16 %v653, %v652
        %s655 = scalar_lea.vmem [#allocation10], 20
        %v656 = vld [vmem:[%s655] sm:$0xf]
        %v657 = vld [vmem:[%s655 + $0x4] sm:$0xf]
        %v658 = vld [vmem:[%s655 + $0x8] sm:$0xf]
        %v659 = vld [vmem:[%s655 + $0xc] sm:$0xf]
        %v660 = vld [vmem:[%s655 + $0x10] sm:$0xf]
        %v666 = vunpack.c.l.b16 %v656
        %v667 = vunpack.c.l.b16 %v657
        %v668 = vunpack.c.l.b16 %v658
        %v669 = vunpack.c.l.b16 %v659
        %v670 = vunpack.c.l.b16 %v660
        %v671 = vpack.c.b16 %v667, %v666
        %v672 = vpack.c.b16 %v669, %v668
        %v673 = vpack.c.b16 %v670, %v670
        %v677 = vsel %vm613, %v654, 0
        %v680 = vsel %vm617, %v673, 0
        %682 = vmatpush.bf16.msra.mxu0 0
        %683 = vmatpush.bf16.msra.mxu0 0
        %684 = vmatpush.bf16.msra.mxu0 0
        %685 = vmatpush.bf16.msra.mxu0 0
        %686 = vmatpush.bf16.msra.mxu0 0
        %687 = vmatpush.bf16.msra.mxu0 %v680
        %688 = vmatpush.bf16.msra.mxu0 %v672
        %689 = vmatpush.bf16.msra.mxu0 %v671
        %690 = vmatmul.bf16.gmra.mxu0 %v677
        %v691 = vpop.f32.mrf.mxu0
        %v692 = vadd.f32 0.0, %v691
        %v693 = vpop.f32.mrf.mxu0
        %v694 = vadd.f32 0.0, %v693
        %695 = vdwg.mxu0
        %v701 = vunpack.c.l.b16 %v642
        %v702 = vunpack.c.l.b16 %v643
        %v703 = vunpack.c.l.b16 %v644
        %v704 = vunpack.c.l.b16 %v645
        %v705 = vunpack.c.l.b16 %v646
        %v706 = vpack.c.b16 %v702, %v701
        %v707 = vpack.c.b16 %v704, %v703
        %v708 = vpack.c.b16 %v705, %v705
        %v712 = vsel %vm613, %v641, 0
        %v715 = vsel %vm617, %v708, 0
        %717 = vmatpush.bf16.msra.mxu0 0
        %718 = vmatpush.bf16.msra.mxu0 0
        %719 = vmatpush.bf16.msra.mxu0 0
        %720 = vmatpush.bf16.msra.mxu0 0
        %721 = vmatpush.bf16.msra.mxu0 0
        %722 = vmatpush.bf16.msra.mxu0 %v715
        %723 = vmatpush.bf16.msra.mxu0 %v707
        %724 = vmatpush.bf16.msra.mxu0 %v706
        %725 = vmatmul.bf16.gmra.mxu0 %v712
        %v726 = vpop.f32.mrf.mxu0
        %v727 = vadd.f32 %v692, %v726
        %v728 = vpop.f32.mrf.mxu0
        %v729 = vadd.f32 %v694, %v728
        %730 = vdwg.mxu0
        %s731 = scalar_lea.vmem %s499, 16 [#allocation5]
        %v732 = vld [vmem:[%s731] sm:$0xf]
        %v733 = vld [vmem:[%s731 + $0x4] sm:$0xf]
        %v734 = vunpack.c.l.bf16 %v732
        %v735 = vunpack.c.l.bf16 %v733
        %v736 = vmul.f32 %v631, %v734
        %v737 = vmul.f32 %v633, %v735
        %v738 = vpack.c.bf16 %v737, %v736
        %s739 = scalar_lea.vmem [#allocation10], 40
        %v740 = vld [vmem:[%s739] sm:$0xf]
        %v741 = vld [vmem:[%s739 + $0x4] sm:$0xf]
        %v742 = vld [vmem:[%s739 + $0x8] sm:$0xf]
        %v743 = vld [vmem:[%s739 + $0xc] sm:$0xf]
        %v744 = vld [vmem:[%s739 + $0x10] sm:$0xf]
        %v750 = vunpack.c.l.b16 %v740
        %v751 = vunpack.c.l.b16 %v741
        %v752 = vunpack.c.l.b16 %v742
        %v753 = vunpack.c.l.b16 %v743
        %v754 = vunpack.c.l.b16 %v744
        %v755 = vpack.c.b16 %v751, %v750
        %v756 = vpack.c.b16 %v753, %v752
        %v757 = vpack.c.b16 %v754, %v754
        %v761 = vsel %vm613, %v738, 0
        %v764 = vsel %vm617, %v757, 0
        %766 = vmatpush.bf16.msra.mxu0 0
        %767 = vmatpush.bf16.msra.mxu0 0
        %768 = vmatpush.bf16.msra.mxu0 0
        %769 = vmatpush.bf16.msra.mxu0 0
        %770 = vmatpush.bf16.msra.mxu0 0
        %771 = vmatpush.bf16.msra.mxu0 %v764
        %772 = vmatpush.bf16.msra.mxu0 %v756
        %773 = vmatpush.bf16.msra.mxu0 %v755
        %774 = vmatmul.bf16.gmra.mxu0 %v761
        %v775 = vpop.f32.mrf.mxu0
        %v776 = vadd.f32 0.0, %v775
        %v777 = vpop.f32.mrf.mxu0
        %v778 = vadd.f32 0.0, %v777
        %779 = vdwg.mxu0
        %v780 = vadd.f32 %v727, %v776
        %v781 = vadd.f32 %v729, %v778
        %v782 = vld [vmem:[%s6] sm:$0x1]
        %v784 = vperm.slane %v782, 0
        %v786 = vadd.f32 %v780, %v784
        %v787 = vadd.f32 %v781, %v784
        %790 = vrot.lane.b32.xlu0 %v786, 114
        %v791 = vpop.permute.xlu0 %790
        %792 = vrot.lane.b32.xlu0 %v787, 114
        %v793 = vpop.permute.xlu0 %792
        %v796 = vmax.f32 %v786, %v791
        %v797 = vmax.f32 %v787, %v793
        %798 = vrot.lane.b32.xlu0 %v786, 100
        %v799 = vpop.permute.xlu0 %798
        %800 = vrot.lane.b32.xlu0 %v787, 100
        %v801 = vpop.permute.xlu0 %800
        %v804 = vmax.f32 %v796, %v799
        %v805 = vmax.f32 %v797, %v801
        %v806 = vsub.f32 %v786, %v804
        %v807 = vsub.f32 %v787, %v805
        %v808 = vmul.f32 %v806, 1.442695
        %v809 = vpow.pop %v808
        %v810 = vmul.f32 %v807, 1.442695
        %v811 = vpow.pop %v810
        %814 = vrot.lane.b32.xlu0 %v804, 14
        %v815 = vpop.permute.xlu0 %814
        %816 = vrot.lane.b32.xlu0 %v805, 14
        %v817 = vpop.permute.xlu0 %816
        %v820 = vsub.f32 %v786, %v815
        %v821 = vsub.f32 %v787, %v817
        %v822 = vmul.f32 %v820, 1.442695
        %v823 = vpow.pop %v822
        %v824 = vmul.f32 %v821, 1.442695
        %v825 = vpow.pop %v824
        %826 = vrot.lane.b32.xlu0 %v804, 28
        %v827 = vpop.permute.xlu0 %826
        %828 = vrot.lane.b32.xlu0 %v805, 28
        %v829 = vpop.permute.xlu0 %828
        %v832 = vsub.f32 %v786, %v827
        %v833 = vsub.f32 %v787, %v829
        %v834 = vmul.f32 %v832, 1.442695
        %v835 = vpow.pop %v834
        %v836 = vmul.f32 %v833, 1.442695
        %v837 = vpow.pop %v836
        %840 = vrot.lane.b32.xlu0 %v823, 114
        %v841 = vpop.permute.xlu0 %840
        %842 = vrot.lane.b32.xlu0 %v825, 114
        %v843 = vpop.permute.xlu0 %842
        %v846 = vadd.f32 %v809, %v841
        %v847 = vadd.f32 %v811, %v843
        %850 = vrot.lane.b32.xlu0 %v835, 100
        %v851 = vpop.permute.xlu0 %850
        %852 = vrot.lane.b32.xlu0 %v837, 100
        %v853 = vpop.permute.xlu0 %852
        %v856 = vadd.f32 %v846, %v851
        %v857 = vadd.f32 %v847, %v853
        %v858 = vrcp.pop %v856
        %v859 = vrcp.pop %v857
        %v860 = vmul.f32 %v809, %v858
        %v861 = vmul.f32 %v811, %v859
        %v862 = vpack.c.bf16 %v861, %v860
        %v863 = vld [vmem:[#allocation11] sm:$0xf]
        %v864 = vld [vmem:[#allocation11 + $0x4] sm:$0x7]
        %v867 = vunpack.c.l.b16 %v863
        %v868 = vunpack.c.l.b16 %v864
        %v869 = vpack.c.b16 %v868, %v867
        %vm870 = vcmask 113664
        %v872 = vsel %vm870, %v862, 0
        %vm874 = vcmask 1046528
        %v876 = vsel %vm874, %v869, 0
        %878 = vmatpush.bf16.msra.mxu0 0
        %879 = vmatpush.bf16.msra.mxu0 0
        %880 = vmatpush.bf16.msra.mxu0 0
        %881 = vmatpush.bf16.msra.mxu0 0
        %882 = vmatpush.bf16.msra.mxu0 0
        %883 = vmatpush.bf16.msra.mxu0 0
        %884 = vmatpush.bf16.msra.mxu0 0
        %885 = vmatpush.bf16.msra.mxu0 %v876
        %886 = vmatmul.bf16.gmra.mxu0 %v872
        %v887 = vpop.f32.mrf.mxu0
        %v888 = vadd.f32 0.0, %v887
        %v889 = vpop.f32.mrf.mxu0
        %v890 = vadd.f32 0.0, %v889
        %891 = vdwg.mxu0
        %v892 = vld [vmem:[%s509] sm:$0xf]
        %v893 = vld [vmem:[%s509 + $0x4] sm:$0xf]
        %v894 = vunpack.c.l.bf16 %v892
        %v895 = vunpack.c.l.bf16 %v893
        %v896 = vmul.f32 %v888, %v894
        %v897 = vmul.f32 %v890, %v895
        %900 = vrot.lane.b32.xlu0 %v858, 14
        %v901 = vpop.permute.xlu0 %900
        %902 = vrot.lane.b32.xlu0 %v859, 14
        %v903 = vpop.permute.xlu0 %902
        %v906 = vmul.f32 %v823, %v901
        %v907 = vmul.f32 %v825, %v903
        %v908 = vpack.c.bf16 %v907, %v906
        %910 = vrot.lane.b32.xlu0 %v908, 114
        %v911 = vpop.permute.xlu0 %910
        %v913 = vsel %vm870, %v911, 0
        %915 = vmatpush.bf16.msra.mxu0 0
        %916 = vmatpush.bf16.msra.mxu0 0
        %917 = vmatpush.bf16.msra.mxu0 0
        %918 = vmatpush.bf16.msra.mxu0 0
        %919 = vmatpush.bf16.msra.mxu0 0
        %920 = vmatpush.bf16.msra.mxu0 0
        %921 = vmatpush.bf16.msra.mxu0 0
        %922 = vmatpush.bf16.msra.mxu0 %v876
        %923 = vmatmul.bf16.gmra.mxu0 %v913
        %v924 = vpop.f32.mrf.mxu0
        %v925 = vadd.f32 0.0, %v924
        %v926 = vpop.f32.mrf.mxu0
        %v927 = vadd.f32 0.0, %v926
        %928 = vdwg.mxu0
        %s929 = scalar_lea.vmem %s509, 8 [#allocation7]
        %v930 = vld [vmem:[%s929] sm:$0xf]
        %v931 = vld [vmem:[%s929 + $0x4] sm:$0xf]
        %v932 = vunpack.c.l.bf16 %v930
        %v933 = vunpack.c.l.bf16 %v931
        %v934 = vmul.f32 %v925, %v932
        %v935 = vmul.f32 %v927, %v933
        %v936 = vadd.f32 %v896, %v934
        %v937 = vadd.f32 %v897, %v935
        %938 = vrot.lane.b32.xlu0 %v858, 28
        %v939 = vpop.permute.xlu0 %938
        %940 = vrot.lane.b32.xlu0 %v859, 28
        %v941 = vpop.permute.xlu0 %940
        %v944 = vmul.f32 %v835, %v939
        %v945 = vmul.f32 %v837, %v941
        %v946 = vpack.c.bf16 %v945, %v944
        %948 = vrot.lane.b32.xlu0 %v946, 100
        %v949 = vpop.permute.xlu0 %948
        %v951 = vsel %vm870, %v949, 0
        %953 = vmatpush.bf16.msra.mxu0 0
        %954 = vmatpush.bf16.msra.mxu0 0
        %955 = vmatpush.bf16.msra.mxu0 0
        %956 = vmatpush.bf16.msra.mxu0 0
        %957 = vmatpush.bf16.msra.mxu0 0
        %958 = vmatpush.bf16.msra.mxu0 0
        %959 = vmatpush.bf16.msra.mxu0 0
        %960 = vmatpush.bf16.msra.mxu0 %v876
        %961 = vmatmul.bf16.gmra.mxu0 %v951
        %v962 = vpop.f32.mrf.mxu0
        %v963 = vadd.f32 0.0, %v962
        %v964 = vpop.f32.mrf.mxu0
        %v965 = vadd.f32 0.0, %v964
        %966 = vdwg.mxu0
        %s967 = scalar_lea.vmem %s509, 16 [#allocation7]
        %v968 = vld [vmem:[%s967] sm:$0xf]
        %v969 = vld [vmem:[%s967 + $0x4] sm:$0xf]
        %v970 = vunpack.c.l.bf16 %v968
        %v971 = vunpack.c.l.bf16 %v969
        %v972 = vmul.f32 %v963, %v970
        %v973 = vmul.f32 %v965, %v971
        %v974 = vadd.f32 %v936, %v972
        %v975 = vadd.f32 %v937, %v973
        %v976 = vpack.c.bf16 %v975, %v974
        %v977 = vld [vmem:[#allocation13] sm:$0xf]
        %v978 = vld [vmem:[#allocation13 + $0x4] sm:$0xf]
        %v979 = vld [vmem:[#allocation13 + $0x8] sm:$0xf]
        %v980 = vld [vmem:[#allocation13 + $0xc] sm:$0xf]
        %v981 = vld [vmem:[#allocation13 + $0x10] sm:$0xf]
        %v982 = vld [vmem:[#allocation13 + $0x14] sm:$0xf]
        %v983 = vld [vmem:[#allocation13 + $0x18] sm:$0xf]
        %v984 = vld [vmem:[#allocation13 + $0x1c] sm:$0xf]
        %v985 = vld [vmem:[#allocation13 + $0x20] sm:$0xf]
        %v986 = vld [vmem:[#allocation13 + $0x24] sm:$0xf]
        %v987 = vld [vmem:[#allocation13 + $0x28] sm:$0xf]
        %v988 = vld [vmem:[#allocation13 + $0x2c] sm:$0xf]
        %v989 = vld [vmem:[#allocation13 + $0x30] sm:$0xf]
        %v990 = vld [vmem:[#allocation13 + $0x34] sm:$0xf]
        %v991 = vld [vmem:[%s9] sm:$0x1]
        %v993 = vperm.slane %v991, 0
        %v1009 = vunpack.c.l.b16 %v977
        %v1010 = vunpack.c.l.b16 %v978
        %v1011 = vunpack.c.l.b16 %v979
        %v1012 = vunpack.c.l.b16 %v980
        %v1013 = vunpack.c.l.b16 %v981
        %v1014 = vunpack.c.l.b16 %v982
        %v1015 = vunpack.c.l.b16 %v983
        %v1016 = vunpack.c.l.b16 %v984
        %v1017 = vunpack.c.l.b16 %v985
        %v1018 = vunpack.c.l.b16 %v986
        %v1019 = vunpack.c.l.b16 %v987
        %v1020 = vunpack.c.l.b16 %v988
        %v1021 = vunpack.c.l.b16 %v989
        %v1022 = vunpack.c.l.b16 %v990
        %v1023 = vpack.c.b16 %v1010, %v1009
        %v1024 = vpack.c.b16 %v1012, %v1011
        %v1025 = vpack.c.b16 %v1014, %v1013
        %v1026 = vpack.c.b16 %v1016, %v1015
        %v1027 = vpack.c.b16 %v1018, %v1017
        %v1028 = vpack.c.b16 %v1020, %v1019
        %v1029 = vpack.c.b16 %v1022, %v1021
        %vm1037 = vcmask 916480
        %v1039 = vsel %vm1037, %v976, 0
        %1041 = vmatpush.bf16.msra.mxu0 0
        %1042 = vmatpush.bf16.msra.mxu0 %v1029
        %1043 = vmatpush.bf16.msra.mxu0 %v1028
        %1044 = vmatpush.bf16.msra.mxu0 %v1027
        %1045 = vmatpush.bf16.msra.mxu0 %v1026
        %1046 = vmatpush.bf16.msra.mxu0 %v1025
        %1047 = vmatpush.bf16.msra.mxu0 %v1024
        %1048 = vmatpush.bf16.msra.mxu0 %v1023
        %1049 = vmatmul.bf16.gmra.mxu0 %v1039
        %v1050 = vpop.f32.mrf.mxu0
        %v1051 = vadd.f32 %v993, %v1050
        %v1052 = vpop.f32.mrf.mxu0
        %v1053 = vadd.f32 %v993, %v1052
        %1054 = vdwg.mxu0
        %v1055 = vpack.c.bf16 %v1051, %v1051
        %v1056 = vpack.c.bf16 %v1053, %v1053
        %1057 = vst [vmem:[%s576] sm:$0xf] %v1055
        %1058 = vst [vmem:[%s576 + $0x4] sm:$0xf] %v1056
        %s1059 = sand.u32 %s265, 1
        %s1060 = scalar_lea.sflag [#allocation4], %s1059
        %s1061 = sand.u32 %s265, 1
        %s1062 = smul.addr %s1061, 8
        %s1063 = scalar_lea.vmem [#allocation14], %s1062
        // Predicated region
        $region89: #{tpu_custom_call.1} parent=59 // pred_check
          %p1064 = pneg %p275
        $region90: #{tpu_custom_call.1} parent=59 // pred_check_branch
          %1066 = sbr.rel (%p1064) target = $region92
        $region91: #{tpu_custom_call.1} parent=59 // pred_region
          %s1067 = smul.u32 2, %s32
          %1069 = vsyncadd %s1060, 0
          %s1070 = smul.addr %s1067, 4
          %s1071 = scalar_lea.hbm %s10, %s1070
          %s1072 = sshll.u32 %s1063, 4
          %s1073 = int_to_ptr.vmem [resolvable:$true] %s1072
          %s1074 = sshll.u32 %s1071, 4
          %s1075 = int_to_ptr.hbm [resolvable:$true] %s1074
          %1080 = dma.vmem_to_hbm [thread:$0]  %s1073, 128, %s1075, %s1060, 64, 64, 4
        $region92: #{tpu_custom_call.1} parent=59 // pred_fallthru
          _
      $region60: #{tpu_custom_call.1} parent=5 // pred_fallthru
        _
      %p1081 = scmp.le.s32.totalorder 2, %s27
      // Predicated region
      $region93: #{tpu_custom_call.1} parent=5 // pred_check
        %p1082 = pneg %p1081
      $region94: #{tpu_custom_call.1} parent=5 // pred_check_branch
        %1084 = sbr.rel (%p1082) target = $region96
      $region95: #{tpu_custom_call.1} parent=5 // pred_region
        %s1085 = ssub.s32 %s27, 2
        // Predicated region
        $region97: #{tpu_custom_call.1} parent=95 // pred_check
          %p1086 = pneg %p281
        $region98: #{tpu_custom_call.1} parent=95 // pred_check_branch
          %1088 = sbr.rel (%p1086) target = $region100
        $region99: #{tpu_custom_call.1} parent=95 // pred_region
          %s1089 = sand.u32 %s266, 1
          %s1090 = scalar_lea.sflag [#allocation4], %s1089
          %s1091 = sand.u32 %s266, 1
          %s1092 = smul.addr %s1091, 8
          %s1093 = scalar_lea.vmem [#allocation14], %s1092
          %1095 = dma.done %s1090, 128
        $region100: #{tpu_custom_call.1} parent=95 // pred_fallthru
          _
      $region96: #{tpu_custom_call.1} parent=5 // pred_fallthru
        _
    $region6: #{tpu_custom_call.1} parent=1 // loop_footer
      %s31 = sadd.s32 1, %s27
    $region7: #{tpu_custom_call.1} parent=1 // loop_footer_branch
      %26 = sbr.rel target = $region3
    $region8: #{tpu_custom_call.1} parent=1 // loop_exit
      _
    %1096 = vsyncpa [#allocation3], 1
    %s1097 = scalar_lea.sflag [#allocation3], 1
    %1098 = vsyncpa %s1097, 1
    %1099 = vsyncpa [#allocation6], 1
    %s1100 = scalar_lea.sflag [#allocation6], 1
    %1101 = vsyncpa %s1100, 1
    %1102 = vsyncpa [#allocation9], 1
    %1103 = vsyncpa [#allocation12], 1
    %1104 = vsyncpa [#allocation4], 1
    %s1105 = scalar_lea.sflag [#allocation4], 1
    %1106 = vsyncpa %s1105, 1

</llo_original>
